<compile_context>
chip_gen: v6e
topology: v6e:2x2x1
jax: 0.10.0
libtpu: 0.0.40
codegen_flags: <defaults>
</compile_context>

<pallas_src>
import functools

import jax
import jax.numpy as jnp
from jax import lax
from jax.experimental import pallas as pl
from jax.experimental.pallas import tpu as pltpu


def _dice_reduce_kernel(score_ref, label_ref, out_ref, *, hw, needs_mask, softmax):
    """Accumulate per-class [intersect, z_sum, y_sum] over one (C, TM, 128) tile.

    score_ref: (C, TM, 128) tile of class scores (native dtype, upcast here).
    label_ref: (TM, 128) int8/int32 tile of class labels.
    out_ref  : (3, C) float32 per-batch accumulator, resident across the
               spatial-chunk grid axis.
    """
    j = pl.program_id(1)

    @pl.when(j == 0)
    def _init():
        out_ref[...] = jnp.zeros_like(out_ref)

    s = score_ref[...].astype(jnp.float32)            # (C, TM, 128) f32
    t = label_ref[...].astype(jnp.int32)              # (TM, 128) i32
    n_cls, tm, lane = s.shape

    if softmax:
        # Fused, numerically-stable softmax over the class (leading) axis.
        s = s - jnp.max(s, axis=0, keepdims=True)
        e = jnp.exp(s)                                 # EUP slot
        s = e * pl.reciprocal(jnp.sum(e, axis=0, keepdims=True))  # exact recip

    cls_ids = lax.broadcasted_iota(jnp.int32, (n_cls, 1, 1), 0)
    m = t[None, :, :] == cls_ids                       # (C, TM, 128) bool one-hot

    def _sum_last2(x):
        return jnp.sum(jnp.sum(x, axis=-1), axis=-1)   # lane reduce, sublane reduce

    def _partial(s_val, m_val):
        inter = _sum_last2(jnp.where(m_val, s_val, 0.0))          # (C,)
        z = _sum_last2(s_val * s_val)                             # (C,)
        y = _sum_last2(m_val.astype(jnp.float32))                 # (C,)  onehot == onehot^2
        return jnp.stack([inter, z, y], axis=0)                   # (3, C)

    if needs_mask:
        last = pl.num_programs(1) - 1

        @pl.when(j != last)
        def _interior():                               # fast, mask-free path
            out_ref[...] += _partial(s, m)

        @pl.when(j == last)
        def _edge():                                   # mask garbage rows / padded tail
            row = lax.broadcasted_iota(jnp.int32, (1, tm, lane), 1)
            col = lax.broadcasted_iota(jnp.int32, (1, tm, lane), 2)
            valid = (j * tm + row) * lane + col < hw   # (1, TM, 128) bool
            out_ref[...] += _partial(jnp.where(valid, s, 0.0), m & valid)
    else:
        out_ref[...] += _partial(s, m)


def _choose_tm(n_rows, n_classes, score_itemsize, label_itemsize, softmax, gran):
    """Row-tile size (rows of 128 lanes) fitting a conservative VMEM budget."""
    lane = 128
    n_temps = 6 + (2 if softmax else 0)                # live f32 (C, TM, 128) temporaries
    per_row = lane * (2 * n_classes * score_itemsize   # double-buffered score tile
                      + 2 * label_itemsize             # double-buffered label tile
                      + n_temps * n_classes * 4        # f32 temporaries (rows gran-aligned)
                      + 2 * 4)                         # label upcast / masks / iotas
    budget = 16 * 1024 * 1024
    tm = int(budget // per_row)
    tm = max(gran, (tm // gran) * gran)
    tm = min(tm, 512)                                  # <= 64K lanes per grid step
    if n_rows >= gran:
        tm = min(tm, (n_rows // gran) * gran)          # never exceed the row extent
    else:
        tm = n_rows                                    # tiny input: full-extent row block
    return int(tm)


@functools.partial(jax.jit, static_argnames=("n_classes", "softmax"))
def dice_loss(inputs, target, *, n_classes, weight=None, softmax=False):
    """Pallas implementation of DiceLoss.forward.

    inputs: (B, C, H, W) float scores (NCHW, same as PyTorch).
    target: (B, H, W) integer class labels.
    """
    B, C, H, W = inputs.shape
    assert C == n_classes, f"predict C={C} & n_classes={n_classes} mismatch"
    HW = H * W
    LANE = 128

    hw_pad = pl.cdiv(HW, LANE) * LANE
    n_rows = hw_pad // LANE

    use_int8 = (n_classes <= 127) and (n_rows >= 32)
    label_dtype = jnp.int8 if use_int8 else jnp.int32
    gran = 32 if use_int8 else 8

    score = inputs.reshape(B, C, HW)                   # free reshape, native dtype
    labels = target.reshape(B, HW).astype(label_dtype)
    if hw_pad != HW:
        # TODO(synk): rare ragged-HW case pays a one-time pad copy so the free
        # minor-dim split to (rows, 128) is possible; pad is masked in-kernel.
        score = jnp.pad(score, ((0, 0), (0, 0), (0, hw_pad - HW)))
        labels = jnp.pad(labels, ((0, 0), (0, hw_pad - HW)))
    score = score.reshape(B, C, n_rows, LANE)
    labels = labels.reshape(B, n_rows, LANE)

    tm = _choose_tm(n_rows, C, jnp.dtype(score.dtype).itemsize,
                    jnp.dtype(label_dtype).itemsize, softmax, gran)
    n_chunks = pl.cdiv(n_rows, tm)
    needs_mask = (n_chunks * tm * LANE != HW)

    kernel = functools.partial(_dice_reduce_kernel, hw=HW,
                               needs_mask=needs_mask, softmax=softmax)

    partials = pl.pallas_call(
        kernel,
        out_shape=jax.ShapeDtypeStruct((B, 3, C), jnp.float32),
        grid_spec=pltpu.PrefetchScalarGridSpec(
            num_scalar_prefetch=0,
            grid=(B, n_chunks),
            in_specs=[
                pl.BlockSpec((None, C, tm, LANE), lambda b, j: (b, 0, j, 0)),  # scores
                pl.BlockSpec((None, tm, LANE), lambda b, j: (b, j, 0)),        # labels
            ],
            out_specs=pl.BlockSpec((None, 3, C), lambda b, j: (b, 0, 0)),
        ),
        compiler_params=pltpu.CompilerParams(
            dimension_semantics=("parallel", "arbitrary"),
            vmem_limit_bytes=32 * 1024 * 1024,
        ),
    )(score, labels)

    sums = jnp.sum(partials, axis=0)                   # (3, C)
    intersect, z_sum, y_sum = sums[0], sums[1], sums[2]

    smooth = 1e-05
    dice = 1.0 - (2.0 * intersect + smooth) / (z_sum + y_sum + smooth)

    if weight is None:
        w = jnp.ones((C,), jnp.float32)
    else:
        w = jnp.asarray(weight, jnp.float32)

    # TODO(synk): the PyTorch module also builds `class_wise_dice` via .item()
    # (host sync, unused for the returned loss) — intentionally omitted.
    return jnp.sum(dice * w) / n_classes


def _dice_loss_ref(inputs, target, n_classes, weight=None, softmax=False):
    """Pure-JAX reference mirroring the PyTorch module (for validation)."""
    if softmax:
        inputs = jax.nn.softmax(inputs, axis=1)
    onehot = (target[:, None, :, :] == jnp.arange(n_classes)[None, :, None, None])
    onehot = onehot.astype(jnp.float32)
    if weight is None:
        weight = [1.0] * n_classes
    smooth = 1e-05
    loss = 0.0
    for i in range(n_classes):
        s = inputs[:, i].astype(jnp.float32)
        t = onehot[:, i]
        inter = jnp.sum(s * t)
        y = jnp.sum(t * t)
        z = jnp.sum(s * s)
        d = 1.0 - (2.0 * inter + smooth) / (z + y + smooth)
        loss = loss + d * weight[i]
    return loss / n_classes


if __name__ == "__main__":
    key = jax.random.PRNGKey(0)
    k1, k2, k3, k4, k5, k6 = jax.random.split(key, 6)

    # Case 1: spec demo shape (B=2, C=4, 16x16), no softmax.
    B, C, H, W = 2, 4, 16, 16
    x = jax.random.uniform(k1, (B, C, H, W), dtype=jnp.float32)
    t = jax.random.randint(k2, (B, H, W), 0, C, dtype=jnp.int32)
    out = jax.block_until_ready(dice_loss(x, t, n_classes=C))
    ref = _dice_loss_ref(x, t, C)
    assert jnp.allclose(out, ref, rtol=1e-5, atol=1e-6), (out, ref)

    # Case 2: fused softmax + class weights, HW exactly tiled (fast path, int8 labels).
    B2, C2, H2, W2 = 1, 3, 64, 64
    x2 = jax.random.normal(k3, (B2, C2, H2, W2), dtype=jnp.float32)
    t2 = jax.random.randint(k4, (B2, H2, W2), 0, C2, dtype=jnp.int32)
    w2 = jnp.array([1.0, 0.5, 2.0], jnp.float32)
    out2 = jax.block_until_ready(dice_loss(x2, t2, n_classes=C2, weight=w2, softmax=True))
    ref2 = _dice_loss_ref(x2, t2, C2, weight=[1.0, 0.5, 2.0], softmax=True)
    assert jnp.allclose(out2, ref2, rtol=1e-4, atol=1e-5), (out2, ref2)

    # Case 3: ragged spatial extent, multiple chunks (interior fast path +
    # masked edge tile + wrapper pad + int8 labels).
    B3, C3, H3, W3 = 1, 3, 250, 300
    x3 = jax.random.uniform(k5, (B3, C3, H3, W3), dtype=jnp.float32)
    t3 = jax.random.randint(k6, (B3, H3, W3), 0, C3, dtype=jnp.int32)
    out3 = jax.block_until_ready(dice_loss(x3, t3, n_classes=C3))
    ref3 = _dice_loss_ref(x3, t3, C3)
    assert jnp.allclose(out3, ref3, rtol=1e-4, atol=1e-5), (out3, ref3)

    print("KERNEL_OK")
</pallas_src>

<mosaic_0001>
module attributes {stable_mosaic.version = 11 : i64} {
  func.func @_dice_reduce_kernel(%arg0: i32, %arg1: i32, %arg2: memref<1x4x2x128xf32, #tpu.memory_space<vmem>>, %arg3: memref<1x2x128xi32, #tpu.memory_space<vmem>>, %arg4: memref<1x3x4xf32, #tpu.memory_space<vmem>>) attributes {dimension_semantics = [#tpu.dimension_semantics<parallel>, #tpu.dimension_semantics<arbitrary>], iteration_bounds = array<i64: 2, 1>, scalar_prefetch = 0 : i64, scratch_operands = 0 : i64, tpu.core_type = #tpu.core_type<tc>, window_params = [{transform_indices = @transform_0, window_bounds = array<i64: 1, 4, 2, 128>}, {transform_indices = @transform_1, window_bounds = array<i64: 1, 2, 128>}, {transform_indices = @transform_2, window_bounds = array<i64: 1, 3, 4>}]} {
    %c0_i32 = arith.constant 0 : i32
    %0 = arith.cmpi eq, %arg1, %c0_i32 : i32
    %1 = arith.extui %0 : i1 to i32
    %c0_i32_0 = arith.constant 0 : i32
    %2 = arith.cmpi ne, %1, %c0_i32_0 : i32
    scf.if %2 {
      %cst_19 = arith.constant 0.000000e+00 : f32
      %33 = vector.broadcast %cst_19 : f32 to vector<3x4xf32>
      %c0_20 = arith.constant 0 : index
      %c0_21 = arith.constant 0 : index
      %c0_22 = arith.constant 0 : index
      %34 = vector.load %arg4[%c0_20, %c0_21, %c0_22] : memref<1x3x4xf32, #tpu.memory_space<vmem>>, vector<1x3x4xf32>
      %35 = vector.shape_cast %34 : vector<1x3x4xf32> to vector<3x4xf32>
      %36 = vector.shape_cast %33 : vector<3x4xf32> to vector<1x3x4xf32>
      tpu.vector_store %arg4[%c0_20, %c0_21, %c0_22], %36 {strides = array<i32>} : memref<1x3x4xf32, #tpu.memory_space<vmem>>, vector<1x3x4xf32>,
    } else {
    }
    %c0 = arith.constant 0 : index
    %c0_1 = arith.constant 0 : index
    %c0_2 = arith.constant 0 : index
    %c0_3 = arith.constant 0 : index
    %3 = vector.load %arg2[%c0, %c0_1, %c0_2, %c0_3] : memref<1x4x2x128xf32, #tpu.memory_space<vmem>>, vector<1x4x2x128xf32>
    %4 = vector.shape_cast %3 : vector<1x4x2x128xf32> to vector<4x2x128xf32>
    %c0_4 = arith.constant 0 : index
    %c0_5 = arith.constant 0 : index
    %c0_6 = arith.constant 0 : index
    %5 = vector.load %arg3[%c0_4, %c0_5, %c0_6] : memref<1x2x128xi32, #tpu.memory_space<vmem>>, vector<1x2x128xi32>
    %6 = vector.shape_cast %5 : vector<1x2x128xi32> to vector<2x128xi32>
    %7 = tpu.iota {dimensions = array<i32: 0>} : vector<4x1x1xi32>
    %8 = vector.shape_cast %6 : vector<2x128xi32> to vector<1x2x128xi32>
    %9 = vector.broadcast %8 : vector<1x2x128xi32> to vector<4x2x128xi32>
    %10 = vector.broadcast %7 : vector<4x1x1xi32> to vector<4x2x128xi32>
    %11 = arith.cmpi eq, %9, %10 : vector<4x2x128xi32>
    %c0_7 = arith.constant 0 : index
    %c0_8 = arith.constant 0 : index
    %c0_9 = arith.constant 0 : index
    %12 = vector.load %arg4[%c0_7, %c0_8, %c0_9] : memref<1x3x4xf32, #tpu.memory_space<vmem>>, vector<1x3x4xf32>
    %13 = vector.shape_cast %12 : vector<1x3x4xf32> to vector<3x4xf32>
    %cst = arith.constant 0.000000e+00 : f32
    %14 = vector.broadcast %cst : f32 to vector<4x2x128xf32>
    %15 = arith.select %11, %4, %14 : vector<4x2x128xi1>, vector<4x2x128xf32>
    %cst_10 = arith.constant dense<0.000000e+00> : vector<4x2xf32>
    %16 = vector.multi_reduction <add>, %15, %cst_10 [2] : vector<4x2x128xf32> to vector<4x2xf32>
    %cst_11 = arith.constant dense<0.000000e+00> : vector<4xf32>
    %17 = vector.multi_reduction <add>, %16, %cst_11 [1] : vector<4x2xf32> to vector<4xf32>
    %18 = arith.mulf %4, %4 : vector<4x2x128xf32>
    %cst_12 = arith.constant dense<0.000000e+00> : vector<4x2xf32>
    %19 = vector.multi_reduction <add>, %18, %cst_12 [2] : vector<4x2x128xf32> to vector<4x2xf32>
    %cst_13 = arith.constant dense<0.000000e+00> : vector<4xf32>
    %20 = vector.multi_reduction <add>, %19, %cst_13 [1] : vector<4x2xf32> to vector<4xf32>
    %21 = arith.extui %11 : vector<4x2x128xi1> to vector<4x2x128xi32>
    %22 = arith.sitofp %21 : vector<4x2x128xi32> to vector<4x2x128xf32>
    %cst_14 = arith.constant dense<0.000000e+00> : vector<4x2xf32>
    %23 = vector.multi_reduction <add>, %22, %cst_14 [2] : vector<4x2x128xf32> to vector<4x2xf32>
    %cst_15 = arith.constant dense<0.000000e+00> : vector<4xf32>
    %24 = vector.multi_reduction <add>, %23, %cst_15 [1] : vector<4x2xf32> to vector<4xf32>
    %25 = vector.shape_cast %17 : vector<4xf32> to vector<1x4xf32>
    %26 = vector.shape_cast %20 : vector<4xf32> to vector<1x4xf32>
    %27 = vector.shape_cast %24 : vector<4xf32> to vector<1x4xf32>
    %28 = tpu.concatenate %25, %26, %27 in 0 : vector<1x4xf32>, vector<1x4xf32>, vector<1x4xf32> -> vector<3x4xf32>
    %29 = arith.addf %13, %28 : vector<3x4xf32>
    %c0_16 = arith.constant 0 : index
    %c0_17 = arith.constant 0 : index
    %c0_18 = arith.constant 0 : index
    %30 = vector.load %arg4[%c0_16, %c0_17, %c0_18] : memref<1x3x4xf32, #tpu.memory_space<vmem>>, vector<1x3x4xf32>
    %31 = vector.shape_cast %30 : vector<1x3x4xf32> to vector<3x4xf32>
    %32 = vector.shape_cast %29 : vector<3x4xf32> to vector<1x3x4xf32>
    tpu.vector_store %arg4[%c0_16, %c0_17, %c0_18], %32 {strides = array<i32>} : memref<1x3x4xf32, #tpu.memory_space<vmem>>, vector<1x3x4xf32>,
    return
  }
  func.func @transform_0(%arg0: i32, %arg1: i32) -> (i32, i32, i32, i32) {
    %c0_i32 = arith.constant 0 : i32
    %c0_i32_0 = arith.constant 0 : i32
    %c0_i32_1 = arith.constant 0 : i32
    return %arg0, %c0_i32, %arg1, %c0_i32_0 : i32, i32, i32, i32
  }
  func.func @transform_1(%arg0: i32, %arg1: i32) -> (i32, i32, i32) {
    %c0_i32 = arith.constant 0 : i32
    %c0_i32_0 = arith.constant 0 : i32
    return %arg0, %arg1, %c0_i32 : i32, i32, i32
  }
  func.func @transform_2(%arg0: i32, %arg1: i32) -> (i32, i32, i32) {
    %c0_i32 = arith.constant 0 : i32
    %c0_i32_0 = arith.constant 0 : i32
    %c0_i32_1 = arith.constant 0 : i32
    return %arg0, %c0_i32, %c0_i32_0 : i32, i32, i32
  }
}

</mosaic_0001>

<llo_original>
// kernel: dice_loss.1
$region0: #{dice_loss.1}
  #allocation0 [shape = 'u32[]', space=smem, size = 0x4, offset = 0x4, fixed_abs, tag = 'smem constant byte address 0x4 - core index']
  #allocation1 [shape = 'u32[144,128]{1,0:T(1,128)}', space=vmem, size = 0x12000, scoped, tag = 'internal scratch']
  %s0 = inlined_call_operand.vmem [shape: f32[2,4,2,128], index: 0, kind: input, shape index: {}]
  %s1 = inlined_call_operand.vmem [shape: s32[2,2,128], index: 1, kind: input, shape index: {}]
  %s2 = inlined_call_operand.vmem [shape: f32[2,3,4], index: 2, kind: output, shape index: {}]
  %s3 = sld [smem:[#allocation0]]
  $region45: #{dice_loss.1} parent=0
    _
  %s5 = ssub.s32 1, %s3
  %s6 = scalar_select 0, %s5, %s3
  loop: start=0, step=1, limit=4
  $region2: #{dice_loss.1} parent=0 // loop_pre_header
    _
  $region3: #{dice_loss.1} parent=0 // loop_header
    %s8 = sphi 0, %s12
    %p9 = scmp.ge.s32.totalorder %s8, 4
    %s15 = sphi 0, %s27
    %s16 = sphi 0, %s23
    %s17 = sphi 0, %s15
    %s18 = sphi 0, %s16
    %s19 = sphi 0, %s17
    %s20 = sphi 0, %s18
    %s32 = sphi 0, %s34
    %s35 = sphi 0, %s32
    %s36 = sphi 0, %s35
    %s52 = sphi 0, %s36
    %s60 = sphi 0, %s62
    %s63 = sphi 0, %s60
    %s64 = sphi 0, %s63
    %s80 = sphi 0, %s64
    %s86 = sphi 0, %s88
    %s89 = sphi 0, %s86
    %s90 = sphi 0, %s89
    %s106 = sphi 0, %s90
  $region4: #{dice_loss.1} parent=0 // loop_header_branch
    %11 = sbr.rel (%p9) target = $region8
  $region5: #{dice_loss.1} parent=0 // loop_body
    %s13 = ssub.s32 %s8, 1
    %s14 = ssub.s32 %s8, 2
    %s21 = sadd.s32 1, %s16
    %p22 = scmp.ge.s32.totalorder %s21, 1
    %s23 = scalar_select %p22, 0, %s21
    %s24 = sadd.s32 1, %s15
    %s25 = scalar_select %p22, %s24, %s15
    %p26 = scmp.ge.s32.totalorder %s25, 2
    %s27 = scalar_select %p26, 0, %s25
    %s28 = ssub.s32 %s15, %s27
    %s29 = ssub.s32 %s16, %s23
    %s30 = sor.u32 %s28, %s29
    %p31 = scmp.eq.s32.totalorder %s30, 0
    %s33 = sadd.s32 %s32, 1
    %s34 = scalar_select %p31, %s32, %s33
    %p37 = pneg %p31
    %p38 = scmp.eq.s32.totalorder %s8, 1
    %p39 = por %p37, %p38
    %p40 = scmp.ne.s32.totalorder %s32, %s35
    %p41 = scmp.eq.s32.totalorder %s8, 0
    %p42 = por %p40, %p41
    %p43 = scmp.ne.s32.totalorder %s32, %s35
    %p44 = scmp.eq.s32.totalorder %s13, 1
    %p45 = por %p43, %p44
    %p46 = scmp.ne.s32.totalorder %s35, %s36
    %p47 = scmp.eq.s32.totalorder %s13, 0
    %p48 = por %p46, %p47
    %p49 = scmp.ne.s32.totalorder %s35, %s36
    %p50 = scmp.eq.s32.totalorder %s14, 1
    %p51 = por %p49, %p50
    %p53 = scmp.ne.s32.totalorder %s36, %s52
    %p54 = scmp.eq.s32.totalorder %s14, 0
    %p55 = por %p53, %p54
    %s56 = ssub.s32 %s15, %s27
    %s57 = ssub.s32 %s16, %s23
    %s58 = sor.u32 %s56, %s57
    %p59 = scmp.eq.s32.totalorder %s58, 0
    %s61 = sadd.s32 %s60, 1
    %s62 = scalar_select %p59, %s60, %s61
    %p65 = pneg %p59
    %p66 = scmp.eq.s32.totalorder %s8, 1
    %p67 = por %p65, %p66
    %p68 = scmp.ne.s32.totalorder %s60, %s63
    %p69 = scmp.eq.s32.totalorder %s8, 0
    %p70 = por %p68, %p69
    %p71 = scmp.ne.s32.totalorder %s60, %s63
    %p72 = scmp.eq.s32.totalorder %s13, 1
    %p73 = por %p71, %p72
    %p74 = scmp.ne.s32.totalorder %s63, %s64
    %p75 = scmp.eq.s32.totalorder %s13, 0
    %p76 = por %p74, %p75
    %p77 = scmp.ne.s32.totalorder %s63, %s64
    %p78 = scmp.eq.s32.totalorder %s14, 1
    %p79 = por %p77, %p78
    %p81 = scmp.ne.s32.totalorder %s64, %s80
    %p82 = scmp.eq.s32.totalorder %s14, 0
    %p83 = por %p81, %p82
    %s84 = ssub.s32 %s15, %s27
    %p85 = scmp.eq.s32.totalorder %s84, 0
    %s87 = sadd.s32 %s86, 1
    %s88 = scalar_select %p85, %s86, %s87
    %p91 = pneg %p85
    %p92 = scmp.eq.s32.totalorder %s8, 1
    %p93 = por %p91, %p92
    %p94 = scmp.ne.s32.totalorder %s86, %s89
    %p95 = scmp.eq.s32.totalorder %s8, 0
    %p96 = por %p94, %p95
    %p97 = scmp.ne.s32.totalorder %s86, %s89
    %p98 = scmp.eq.s32.totalorder %s13, 1
    %p99 = por %p97, %p98
    %p100 = scmp.ne.s32.totalorder %s89, %s90
    %p101 = scmp.eq.s32.totalorder %s13, 0
    %p102 = por %p100, %p101
    %p103 = scmp.ne.s32.totalorder %s89, %s90
    %p104 = scmp.eq.s32.totalorder %s14, 1
    %p105 = por %p103, %p104
    %p107 = scmp.ne.s32.totalorder %s90, %s106
    %p108 = scmp.eq.s32.totalorder %s14, 0
    %p109 = por %p107, %p108
    %p110 = scmp.le.s32.totalorder 1, %s8
    %p111 = scmp.lt.s32.totalorder %s8, 3
    %p112 = pnand %p110, %p111
    %p113 = pneg %p112
    // Predicated region
    $region9: #{dice_loss.1} parent=5 // pred_check
      _
    $region10: #{dice_loss.1} parent=5 // pred_check_branch
      %115 = sbr.rel (%p112) target = $region12
    $region11: #{dice_loss.1} parent=5 // pred_region
      %s116 = ssub.s32 %s8, 1
    $region12: #{dice_loss.1} parent=5 // pred_fallthru
      _
    %p117 = scmp.lt.s32.totalorder %s8, 2
    // Predicated region
    $region13: #{dice_loss.1} parent=5 // pred_check
      %p118 = pneg %p117
    $region14: #{dice_loss.1} parent=5 // pred_check_branch
      %120 = sbr.rel (%p118) target = $region16
    $region15: #{dice_loss.1} parent=5 // pred_region
      // Predicated region
      $region17: #{dice_loss.1} parent=15 // pred_check
        %p121 = pneg %p42
      $region18: #{dice_loss.1} parent=15 // pred_check_branch
        %123 = sbr.rel (%p121) target = $region20
      $region19: #{dice_loss.1} parent=15 // pred_region
        %p124 = scmp.lt.s32.totalorder %s15, 1
        %s125 = scalar_select %p124, %s15, 1
        %p126 = scmp.lt.s32.totalorder %s16, 0
        %s127 = scalar_select %p126, %s16, 0
        %s128 = smul.addr %s125, 4
        %s129 = sadd.s32 %s127, %s128
        %s130 = smul.addr %s129, 2
        %s131 = scalar_lea.vmem %s0, %s130
      $region20: #{dice_loss.1} parent=15 // pred_fallthru
        _
      // Predicated region
      $region21: #{dice_loss.1} parent=15 // pred_check
        %p132 = pneg %p70
      $region22: #{dice_loss.1} parent=15 // pred_check_branch
        %134 = sbr.rel (%p132) target = $region24
      $region23: #{dice_loss.1} parent=15 // pred_region
        %p135 = scmp.lt.s32.totalorder %s15, 1
        %s136 = scalar_select %p135, %s15, 1
        %p137 = scmp.lt.s32.totalorder %s16, 0
        %s138 = scalar_select %p137, %s16, 0
        %s139 = sadd.s32 %s138, %s136
        %s140 = smul.addr %s139, 2
        %s141 = scalar_lea.vmem %s1, %s140
      $region24: #{dice_loss.1} parent=15 // pred_fallthru
        _
    $region16: #{dice_loss.1} parent=5 // pred_fallthru
      _
    %p142 = scmp.le.s32.totalorder 1, %s8
    %p143 = scmp.lt.s32.totalorder %s8, 3
    %p144 = pnand %p142, %p143
    %p145 = pneg %p144
    // Predicated region
    $region25: #{dice_loss.1} parent=5 // pred_check
      _
    $region26: #{dice_loss.1} parent=5 // pred_check_branch
      %147 = sbr.rel (%p144) target = $region28
    $region27: #{dice_loss.1} parent=5 // pred_region
      %s148 = ssub.s32 %s8, 1
      %p149 = scmp.lt.s32.totalorder %s17, 1
      %s150 = scalar_select %p149, %s17, 1
      %p151 = scmp.lt.s32.totalorder %s18, 0
      %s152 = scalar_select %p151, %s18, 0
      %s153 = smul.addr %s150, 4
      %s154 = sadd.s32 %s152, %s153
      %s155 = smul.addr %s154, 2
      %s156 = scalar_lea.vmem %s0, %s155
      %p157 = pneg %p48
      %p158 = pneg %p45
      %p159 = scmp.lt.s32.totalorder %s17, 1
      %s160 = scalar_select %p159, %s17, 1
      %p161 = scmp.lt.s32.totalorder %s18, 0
      %s162 = scalar_select %p161, %s18, 0
      %s163 = sadd.s32 %s162, %s160
      %s164 = smul.addr %s163, 2
      %s165 = scalar_lea.vmem %s1, %s164
      %p166 = pneg %p76
      %p167 = pneg %p73
      %p168 = pneg %p102
      %p169 = pneg %p99
      %p170 = scmp.lt.s32.totalorder %s17, 1
      %s171 = scalar_select %p170, %s17, 1
      %s172 = smul.addr %s171, 4
      %s173 = scalar_lea.vmem %s2, %s172
      %p174 = scmp.lt.s32.totalorder %s17, 1
      %s175 = scalar_select %p174, %s17, 1
      %p176 = scmp.lt.s32.totalorder %s18, 0
      %s177 = scalar_select %p176, %s18, 0
      %s178 = smul.addr %s175, 4
      %s179 = sadd.s32 %s177, %s178
      %s180 = smul.addr %s179, 2
      %s181 = scalar_lea.vmem %s0, %s180
      %p182 = scmp.lt.s32.totalorder %s17, 1
      %s183 = scalar_select %p182, %s17, 1
      %p184 = scmp.lt.s32.totalorder %s18, 0
      %s185 = scalar_select %p184, %s18, 0
      %s186 = sadd.s32 %s185, %s183
      %s187 = smul.addr %s186, 2
      %s188 = scalar_lea.vmem %s1, %s187
      %p189 = scmp.lt.s32.totalorder %s17, 1
      %s190 = scalar_select %p189, %s17, 1
      %s191 = smul.addr %s190, 4
      %s192 = scalar_lea.vmem %s2, %s191
      %p193 = scmp.eq.s32.totalorder %s18, 0
      // Predicated region
      $region29: #{dice_loss.1} parent=27 // pred_check
        %p194 = pneg %p193
      $region30: #{dice_loss.1} parent=27 // pred_check_branch
        %196 = sbr.rel (%p194) target = $region32
      $region31: #{dice_loss.1} parent=27 // pred_region
        %vm197 = vcmask 26624
        %198 = vst.msk [vmem:[%s192] sm:$0x7] %vm197, 0.0
      $region32: #{dice_loss.1} parent=27 // pred_fallthru
        _
      %v199 = vld [vmem:[%s181] sm:$0x3]
      %v200 = vld [vmem:[%s181 + $0x2] sm:$0x3]
      %v201 = vld [vmem:[%s181 + $0x4] sm:$0x3]
      %v202 = vld [vmem:[%s181 + $0x6] sm:$0x3]
      %v203 = vld [vmem:[%s188] sm:$0x3]
      %vm204 = vcmp.eq.s32.totalorder %v203, 0
      %vm205 = vcmp.eq.s32.totalorder %v203, 1
      %vm206 = vcmp.eq.s32.totalorder %v203, 2
      %vm207 = vcmp.eq.s32.totalorder %v203, 3
      %v208 = vld [vmem:[%s192] sm:$0x7]
      %v209 = vsel %vm204, %v199, 0.0
      %v210 = vsel %vm205, %v200, 0.0
      %v211 = vsel %vm206, %v201, 0.0
      %v212 = vsel %vm207, %v202, 0.0
      %vm213 = vcmask 1041408
      %v214 = vsel %vm213, %v209, 0.0
      %215 = vadd.xlane.f32.xlu0 %v214
      %v216 = vpop.xlane.xlu0 %215
      %v217 = vsel %vm213, %v210, 0.0
      %218 = vadd.xlane.f32.xlu0 %v217
      %v219 = vpop.xlane.xlu0 %218
      %v220 = vsel %vm213, %v211, 0.0
      %221 = vadd.xlane.f32.xlu0 %v220
      %v222 = vpop.xlane.xlu0 %221
      %v223 = vsel %vm213, %v212, 0.0
      %224 = vadd.xlane.f32.xlu0 %v223
      %v225 = vpop.xlane.xlu0 %224
      %v230 = vlaneseq
      %v231 = vand.u32 %v230, 127
      %v232 = vlaneseq
      %v233 = vshrl.u32 %v232, 7
      %v234 = vsub.s32 %v231, %v233
      %v235 = vrot.slane %v216, %v234
      %v236 = vlaneseq
      %v237 = vshrl.u32 %v236, 7
      %v238 = vsub.s32 %v231, %v237
      %v239 = vrot.slane %v219, %v238
      %v240 = vlaneseq
      %v241 = vshrl.u32 %v240, 7
      %v242 = vsub.s32 %v231, %v241
      %v243 = vrot.slane %v222, %v242
      %v244 = vlaneseq
      %v245 = vshrl.u32 %v244, 7
      %v246 = vsub.s32 %v231, %v245
      %v247 = vrot.slane %v225, %v246
      %vm248 = vcmask 1041409
      %v249 = vsel %vm248, %v239, %v235
      %vm250 = vcmask 1042434
      %v251 = vsel %vm250, %v243, %v249
      %vm252 = vcmask 1043459
      %v253 = vsel %vm252, %v247, %v251
      %vm255 = vcmask 11264
      %v256 = vsel %vm255, %v253, 0.0
      %257 = vadd.xlane.f32.xlu0 %v256
      %v258 = vpop.xlane.xlu0 %257
      %v259 = vmul.f32 %v199, %v199
      %v260 = vmul.f32 %v200, %v200
      %v261 = vmul.f32 %v201, %v201
      %v262 = vmul.f32 %v202, %v202
      %v263 = vsel %vm213, %v259, 0.0
      %264 = vadd.xlane.f32.xlu0 %v263
      %v265 = vpop.xlane.xlu0 %264
      %v266 = vsel %vm213, %v260, 0.0
      %267 = vadd.xlane.f32.xlu0 %v266
      %v268 = vpop.xlane.xlu0 %267
      %v269 = vsel %vm213, %v261, 0.0
      %270 = vadd.xlane.f32.xlu0 %v269
      %v271 = vpop.xlane.xlu0 %270
      %v272 = vsel %vm213, %v262, 0.0
      %273 = vadd.xlane.f32.xlu0 %v272
      %v274 = vpop.xlane.xlu0 %273
      %v279 = vlaneseq
      %v280 = vshrl.u32 %v279, 7
      %v281 = vsub.s32 %v231, %v280
      %v282 = vrot.slane %v265, %v281
      %v283 = vlaneseq
      %v284 = vshrl.u32 %v283, 7
      %v285 = vsub.s32 %v231, %v284
      %v286 = vrot.slane %v268, %v285
      %v287 = vlaneseq
      %v288 = vshrl.u32 %v287, 7
      %v289 = vsub.s32 %v231, %v288
      %v290 = vrot.slane %v271, %v289
      %v291 = vlaneseq
      %v292 = vshrl.u32 %v291, 7
      %v293 = vsub.s32 %v231, %v292
      %v294 = vrot.slane %v274, %v293
      %v295 = vsel %vm248, %v286, %v282
      %v296 = vsel %vm250, %v290, %v295
      %v297 = vsel %vm252, %v294, %v296
      %v299 = vsel %vm255, %v297, 0.0
      %300 = vadd.xlane.f32.xlu0 %v299
      %v301 = vpop.xlane.xlu0 %300
      %v302 = vsel %vm204, 1, 0
      %v303 = vsel %vm205, 1, 0
      %v304 = vsel %vm206, 1, 0
      %v305 = vsel %vm207, 1, 0
      %v306 = vcvt.s32.f32 %v302
      %v307 = vcvt.s32.f32 %v303
      %v308 = vcvt.s32.f32 %v304
      %v309 = vcvt.s32.f32 %v305
      %v310 = vsel %vm213, %v306, 0.0
      %311 = vadd.xlane.f32.xlu0 %v310
      %v312 = vpop.xlane.xlu0 %311
      %v313 = vsel %vm213, %v307, 0.0
      %314 = vadd.xlane.f32.xlu0 %v313
      %v315 = vpop.xlane.xlu0 %314
      %v316 = vsel %vm213, %v308, 0.0
      %317 = vadd.xlane.f32.xlu0 %v316
      %v318 = vpop.xlane.xlu0 %317
      %v319 = vsel %vm213, %v309, 0.0
      %320 = vadd.xlane.f32.xlu0 %v319
      %v321 = vpop.xlane.xlu0 %320
      %v326 = vlaneseq
      %v327 = vshrl.u32 %v326, 7
      %v328 = vsub.s32 %v231, %v327
      %v329 = vrot.slane %v312, %v328
      %v330 = vlaneseq
      %v331 = vshrl.u32 %v330, 7
      %v332 = vsub.s32 %v231, %v331
      %v333 = vrot.slane %v315, %v332
      %v334 = vlaneseq
      %v335 = vshrl.u32 %v334, 7
      %v336 = vsub.s32 %v231, %v335
      %v337 = vrot.slane %v318, %v336
      %v338 = vlaneseq
      %v339 = vshrl.u32 %v338, 7
      %v340 = vsub.s32 %v231, %v339
      %v341 = vrot.slane %v321, %v340
      %v342 = vsel %vm248, %v333, %v329
      %v343 = vsel %vm250, %v337, %v342
      %v344 = vsel %vm252, %v341, %v343
      %v346 = vsel %vm255, %v344, 0.0
      %347 = vadd.xlane.f32.xlu0 %v346
      %v348 = vpop.xlane.xlu0 %347
      %v350 = vlaneseq
      %v351 = vshrl.u32 %v350, 7
      %v352 = vsub.s32 %v231, %v351
      %v353 = vrot.slane %v258, %v352
      %v356 = vlaneseq
      %v357 = vshrl.u32 %v356, 7
      %v358 = vsub.s32 %v231, %v357
      %v359 = vrot.slane %v301, %v358
      %v362 = vlaneseq
      %v363 = vshrl.u32 %v362, 7
      %v364 = vsub.s32 %v231, %v363
      %v365 = vrot.slane %v348, %v364
      %vm367 = vcmask 1040384
      %v368 = vsel %vm367, %v353, %v359
      %v369 = vsel %vm213, %v368, %v365
      %v370 = vadd.f32 %v208, %v369
      %vm371 = vcmask 26624
      %372 = vst.msk [vmem:[%s192] sm:$0x7] %vm371, %v370
      %p373 = scmp.lt.s32.totalorder %s17, 1
      %s374 = scalar_select %p373, %s17, 1
      %s375 = smul.addr %s374, 4
      %s376 = scalar_lea.vmem %s2, %s375
      // Predicated region
      $region33: #{dice_loss.1} parent=27 // pred_check
        %p377 = pneg %p99
      $region34: #{dice_loss.1} parent=27 // pred_check_branch
        %379 = sbr.rel (%p377) target = $region36
      $region35: #{dice_loss.1} parent=27 // pred_region
        _
      $region36: #{dice_loss.1} parent=27 // pred_fallthru
        _
    $region28: #{dice_loss.1} parent=5 // pred_fallthru
      _
    %p380 = scmp.le.s32.totalorder 2, %s8
    // Predicated region
    $region37: #{dice_loss.1} parent=5 // pred_check
      %p381 = pneg %p380
    $region38: #{dice_loss.1} parent=5 // pred_check_branch
      %383 = sbr.rel (%p381) target = $region40
    $region39: #{dice_loss.1} parent=5 // pred_region
      %s384 = ssub.s32 %s8, 2
      // Predicated region
      $region41: #{dice_loss.1} parent=39 // pred_check
        %p385 = pneg %p105
      $region42: #{dice_loss.1} parent=39 // pred_check_branch
        %387 = sbr.rel (%p385) target = $region44
      $region43: #{dice_loss.1} parent=39 // pred_region
        %p388 = scmp.lt.s32.totalorder %s19, 1
        %s389 = scalar_select %p388, %s19, 1
        %s390 = smul.addr %s389, 4
        %s391 = scalar_lea.vmem %s2, %s390
      $region44: #{dice_loss.1} parent=39 // pred_fallthru
        _
    $region40: #{dice_loss.1} parent=5 // pred_fallthru
      _
  $region6: #{dice_loss.1} parent=0 // loop_footer
    %s12 = sadd.s32 1, %s8
  $region7: #{dice_loss.1} parent=0 // loop_footer_branch
    %7 = sbr.rel target = $region3
  $region8: #{dice_loss.1} parent=0 // loop_exit
    _

</llo_original>
